<compile_context>
chip_gen: v7x
topology: tpu7x:2x2x1
jax: 0.10.0
libtpu: 0.0.40
codegen_flags: <defaults>
</compile_context>

<pallas_src>
import jax
import jax.numpy as jnp
from jax.experimental import pallas as pl
from jax.experimental.pallas import tpu as pltpu


def _round_up(n, m):
    return ((n + m - 1) // m) * m


def _reranker_kernel(x_ref, w1t_ref, b1c_ref, w2r_ref, b2_ref, o_ref):
    # x_ref:   (bm, D)   f32  streamed per grid step
    # w1t_ref: (H, D)    f32  resident
    # b1c_ref: (H, 1)    f32  resident
    # w2r_ref: (1, H)    f32  resident
    # b2_ref:  (1, 1)    f32  SMEM scalar
    # o_ref:   (1, 1, bm) f32 lane-dense output row for this block
    #
    # Work transposed so the result lands lane-major and no large activation
    # transpose is needed: only the streamed x tile is transposed (XLU).
    xT = x_ref[...].T                                                     # (D, bm)
    hT = jnp.dot(w1t_ref[...], xT, preferred_element_type=jnp.float32)    # (H, bm) MXU
    hT = jnp.maximum(hT + b1c_ref[...], 0.0)                              # bias + ReLU, f32 VPU

    # Dropout(p=0.2) in eval mode == identity.

    out_row = jnp.dot(w2r_ref[...], hT, preferred_element_type=jnp.float32)  # (1, bm) MXU
    o_ref[...] = (out_row + b2_ref[0, 0])[None].astype(o_ref.dtype)          # (1, 1, bm) dense store


def reranker_forward(x, w1, b1, w2, b2, *, block_m=2048):
    """x: (B, D) f32; w1: (D, H); b1: (H,)/(1,H); w2: (H,1)/(H,)/(1,H); b2: scalar-ish."""
    B, D = x.shape
    Din, H = w1.shape
    assert D == Din, "input feature dim mismatch"

    x = jnp.asarray(x, jnp.float32)  # no-op if already f32; no padding, no cast pass

    # Block size: multiple of 8; capped so the parallel grid has >= 2 steps
    # whenever B > 8 (keeps both v7x TensorCores busy).
    bm = min(block_m, _round_up(max(pl.cdiv(B, 2), 8), 8))
    num_blocks = pl.cdiv(B, bm)
    Bp = num_blocks * bm

    # Tiny one-time weight layout prep (16 KiB total), no activation-sized copies.
    w1t = jnp.asarray(w1, jnp.float32).T          # (H, D)
    b1c = jnp.asarray(b1, jnp.float32).reshape(H, 1)
    w2r = jnp.asarray(w2, jnp.float32).reshape(1, H)
    b2s = jnp.asarray(b2, jnp.float32).reshape(1, 1)

    # VMEM per step at bm=2048: x tile 512 KiB (x2 buffers) + xT 512 KiB +
    # hT 512 KiB + weights ~16 KiB  ->  well under the scoped VMEM limit on
    # v5e/v6e/v7x; no vmem_limit_bytes override needed.
    out = pl.pallas_call(
        _reranker_kernel,
        out_shape=jax.ShapeDtypeStruct((num_blocks, 1, bm), jnp.float32),
        grid_spec=pltpu.PrefetchScalarGridSpec(
            num_scalar_prefetch=0,
            grid=(num_blocks,),
            in_specs=[
                pl.BlockSpec((bm, D), lambda i: (i, 0)),   # x tile (streamed; partial last block OK)
                pl.BlockSpec((H, D), lambda i: (0, 0)),    # w1.T (resident)
                pl.BlockSpec((H, 1), lambda i: (0, 0)),    # b1 column (resident)
                pl.BlockSpec((1, H), lambda i: (0, 0)),    # w2 row (resident)
                pl.BlockSpec(memory_space=pltpu.MemorySpace.SMEM),  # b2 scalar
            ],
            out_specs=pl.BlockSpec((1, 1, bm), lambda i: (i, 0, 0)),
        ),
        compiler_params=pltpu.CompilerParams(
            dimension_semantics=("parallel",),
        ),
    )(x, w1t, b1c, w2r, b2s)

    # Lane-dense (num_blocks, 1, bm) -> (B, 1).  Rows past B (partial last
    # block) are garbage and are sliced off here; rows are independent, so no
    # masking is required inside the kernel.
    return out.reshape(Bp, 1)[:B]


def _init_params(key, input_dim=64, hidden_dim=64):
    # Deterministic init mimicking nn.Linear's uniform(-1/sqrt(fan_in), 1/sqrt(fan_in)).
    k1, k2, k3, k4 = jax.random.split(key, 4)
    lim1 = 1.0 / jnp.sqrt(jnp.float32(input_dim))
    lim2 = 1.0 / jnp.sqrt(jnp.float32(hidden_dim))
    w1 = jax.random.uniform(k1, (input_dim, hidden_dim), jnp.float32, -lim1, lim1)
    b1 = jax.random.uniform(k2, (1, hidden_dim), jnp.float32, -lim1, lim1)
    w2 = jax.random.uniform(k3, (hidden_dim, 1), jnp.float32, -lim2, lim2)
    b2 = jax.random.uniform(k4, (1, 1), jnp.float32, -lim2, lim2)
    return w1, b1, w2, b2


if __name__ == "__main__":
    key = jax.random.PRNGKey(0)
    kx, kp = jax.random.split(key)

    input_dim, hidden_dim, batch = 64, 64, 256
    x = jax.random.normal(kx, (batch, input_dim), jnp.float32)
    w1, b1, w2, b2 = _init_params(kp, input_dim, hidden_dim)

    # Default block_m: the bm cap gives bm=128 here -> a 2-step "parallel" grid.
    out = reranker_forward(x, w1, b1, w2, b2)
    out = jax.block_until_ready(out)

    # Pure-JAX reference (eval-mode dropout == identity).  All data paths are
    # f32 now; the tolerance only covers backend-default matmul precision.
    ref = jnp.maximum(x @ w1 + b1, 0.0) @ w2 + b2
    assert out.shape == (batch, 1)
    assert jnp.allclose(out, ref, atol=2e-2, rtol=2e-2), float(jnp.max(jnp.abs(out - ref)))

    print("KERNEL_OK")
</pallas_src>

<mosaic_0001>
module attributes {stable_mosaic.version = 11 : i64} {
  func.func @_reranker_kernel(%arg0: i32, %arg1: memref<128x64xf32, #tpu.memory_space<vmem>>, %arg2: memref<64x64xf32, #tpu.memory_space<vmem>>, %arg3: memref<64x1xf32, #tpu.memory_space<vmem>>, %arg4: memref<1x64xf32, #tpu.memory_space<vmem>>, %arg5: memref<1x1xf32, #tpu.memory_space<smem>>, %arg6: memref<1x1x128xf32, #tpu.memory_space<vmem>>) attributes {dimension_semantics = [#tpu.dimension_semantics<parallel>], iteration_bounds = array<i64: 2>, scalar_prefetch = 0 : i64, scratch_operands = 0 : i64, tpu.core_type = #tpu.core_type<tc>, window_params = [{transform_indices = @transform_0, window_bounds = array<i64: 128, 64>}, {pipeline_mode = #tpu.pipeline_mode<synchronous>, transform_indices = @transform_1, window_bounds = array<i64: 64, 64>}, {pipeline_mode = #tpu.pipeline_mode<synchronous>, transform_indices = @transform_2, window_bounds = array<i64: 64, 1>}, {pipeline_mode = #tpu.pipeline_mode<synchronous>, transform_indices = @transform_3, window_bounds = array<i64: 1, 64>}, {transform_indices = @transform_4, window_bounds = array<i64: 1, 1>}, {transform_indices = @transform_5, window_bounds = array<i64: 1, 1, 128>}]} {
    %c0 = arith.constant 0 : index
    %c0_0 = arith.constant 0 : index
    %0 = vector.load %arg1[%c0, %c0_0] : memref<128x64xf32, #tpu.memory_space<vmem>>, vector<128x64xf32>
    %1 = tpu.transpose %0, [1, 0] : vector<128x64xf32> -> vector<64x128xf32>
    %c0_1 = arith.constant 0 : index
    %c0_2 = arith.constant 0 : index
    %2 = vector.load %arg2[%c0_1, %c0_2] : memref<64x64xf32, #tpu.memory_space<vmem>>, vector<64x64xf32>
    %cst = arith.constant dense<0.000000e+00> : vector<64x128xf32>
    %3 = tpu.matmul %2, %1, %cst {dimension_numbers = #tpu.dot_dimension_numbers<[1], [0], [0], [1], [0, 0, 1, 1], [], []>} : vector<64x64xf32>, vector<64x128xf32>, vector<64x128xf32> -> vector<64x128xf32>
    %c0_3 = arith.constant 0 : index
    %c0_4 = arith.constant 0 : index
    %4 = vector.load %arg3[%c0_3, %c0_4] : memref<64x1xf32, #tpu.memory_space<vmem>>, vector<64x1xf32>
    %5 = vector.broadcast %4 : vector<64x1xf32> to vector<64x128xf32>
    %6 = arith.addf %3, %5 : vector<64x128xf32>
    %cst_5 = arith.constant 0.000000e+00 : f32
    %7 = vector.broadcast %cst_5 : f32 to vector<64x128xf32>
    %8 = arith.maximumf %6, %7 : vector<64x128xf32>
    %c0_6 = arith.constant 0 : index
    %c0_7 = arith.constant 0 : index
    %9 = vector.load %arg4[%c0_6, %c0_7] : memref<1x64xf32, #tpu.memory_space<vmem>>, vector<1x64xf32>
    %cst_8 = arith.constant dense<0.000000e+00> : vector<1x128xf32>
    %10 = tpu.matmul %9, %8, %cst_8 {dimension_numbers = #tpu.dot_dimension_numbers<[1], [0], [0], [1], [0, 0, 1, 1], [], []>} : vector<1x64xf32>, vector<64x128xf32>, vector<1x128xf32> -> vector<1x128xf32>
    %c0_9 = arith.constant 0 : index
    %c0_10 = arith.constant 0 : index
    %11 = memref.load %arg5[%c0_9, %c0_10] : memref<1x1xf32, #tpu.memory_space<smem>>
    %12 = vector.broadcast %11 : f32 to vector<1x128xf32>
    %13 = arith.addf %10, %12 : vector<1x128xf32>
    %14 = vector.shape_cast %13 : vector<1x128xf32> to vector<1x1x128xf32>
    %c0_11 = arith.constant 0 : index
    %c0_12 = arith.constant 0 : index
    %c0_13 = arith.constant 0 : index
    %15 = vector.load %arg6[%c0_11, %c0_12, %c0_13] : memref<1x1x128xf32, #tpu.memory_space<vmem>>, vector<1x1x128xf32>
    tpu.vector_store %arg6[%c0_11, %c0_12, %c0_13], %14 {strides = array<i32>} : memref<1x1x128xf32, #tpu.memory_space<vmem>>, vector<1x1x128xf32>,
    return
  }
  func.func @transform_0(%arg0: i32) -> (i32, i32) {
    %c0_i32 = arith.constant 0 : i32
    %c0_i32_0 = arith.constant 0 : i32
    return %arg0, %c0_i32 : i32, i32
  }
  func.func @transform_1(%arg0: i32) -> (i32, i32) {
    %c0_i32 = arith.constant 0 : i32
    %c0_i32_0 = arith.constant 0 : i32
    %c0_i32_1 = arith.constant 0 : i32
    return %c0_i32, %c0_i32_0 : i32, i32
  }
  func.func @transform_2(%arg0: i32) -> (i32, i32) {
    %c0_i32 = arith.constant 0 : i32
    %c0_i32_0 = arith.constant 0 : i32
    %c0_i32_1 = arith.constant 0 : i32
    return %c0_i32, %c0_i32_0 : i32, i32
  }
  func.func @transform_3(%arg0: i32) -> (i32, i32) {
    %c0_i32 = arith.constant 0 : i32
    %c0_i32_0 = arith.constant 0 : i32
    %c0_i32_1 = arith.constant 0 : i32
    return %c0_i32, %c0_i32_0 : i32, i32
  }
  func.func @transform_4(%arg0: i32) -> (i32, i32) {
    %c0_i32 = arith.constant 0 : i32
    %c0_i32_0 = arith.constant 0 : i32
    %c0_i32_1 = arith.constant 0 : i32
    return %c0_i32, %c0_i32_0 : i32, i32
  }
  func.func @transform_5(%arg0: i32) -> (i32, i32, i32) {
    %c0_i32 = arith.constant 0 : i32
    %c0_i32_0 = arith.constant 0 : i32
    %c0_i32_1 = arith.constant 0 : i32
    return %arg0, %c0_i32, %c0_i32_0 : i32, i32, i32
  }
}

</mosaic_0001>

<llo_original>
// kernel: tpu_custom_call.1
$region0: #{tpu_custom_call.1}
  #allocation0 [shape = 'u32[]', space=smem, size = 0x4, offset = 0x4, fixed_abs, tag = 'smem constant byte address 0x4 - core index']
  #allocation1 [shape = 'u32[144,128]{1,0:T(1,128)}', space=vmem, size = 0x12000, scoped, tag = 'internal scratch']
  #allocation2 [shape = 'f32[1,1]{1,0:T(1,128)S(6)}', space=smem, size = 0x200, scoped, tag = 'scoped memory for tpu_custom_call.1']
  %s0 = inlined_call_operand.vmem [shape: f32[256,64], index: 0, kind: input, shape index: {}]
  %s1 = inlined_call_operand.vmem [shape: f32[64,64], index: 1, kind: input, shape index: {}]
  %s2 = inlined_call_operand.vmem [shape: f32[64,1], index: 2, kind: input, shape index: {}]
  %s3 = inlined_call_operand.vmem [shape: f32[1,64], index: 3, kind: input, shape index: {}]
  %s4 = inlined_call_operand.<no memory space> [shape: f32[1,1], index: 4, kind: input, shape index: {}]
  %s5 = inlined_call_operand.hbm [shape: f32[2,1,128], index: 5, kind: output, shape index: {}]
  %s6 = sld [smem:[#allocation0]]
  $region53: #{tpu_custom_call.1} parent=0
    _
  %s8 = ssub.s32 1, %s6
  %s9 = scalar_select 0, %s8, %s6
  %10 = sst [smem:[#allocation2]] %s4
  $region1: #{tpu_custom_call.1} parent=0
    #allocation3 [shape = 'u8[1024]{0}', space=vmem, size = 0x400, scoped, tag = 'output window, operand 0']
    #allocation4 [shape = 's32[2]{0}', space=sflag, size = 0x8, scoped, tag = 'scoped memory for tpu_custom_call.1']
    %11 = vsyncpa [#allocation4], 0
    %s12 = scalar_lea.sflag [#allocation4], 1
    %13 = vsyncpa %s12, 0
    loop: start=0, step=1, limit=4
    $region2: #{tpu_custom_call.1} parent=1 // loop_pre_header
      _
    $region3: #{tpu_custom_call.1} parent=1 // loop_header
      %s15 = sphi 0, %s19
      %p16 = scmp.ge.s32.totalorder %s15, 4
      %s25 = sphi 0, %s27
      %s28 = sphi 0, %s25
      %s29 = sphi 0, %s28
      %s45 = sphi 0, %s29
      %s49 = sphi 0, %s49
      %s51 = sphi 0, %s49
      %s52 = sphi 0, %s51
      %s66 = sphi 0, %s52
      %s70 = sphi 0, %s70
      %s72 = sphi 0, %s70
      %s73 = sphi 0, %s72
      %s87 = sphi 0, %s73
      %s91 = sphi 0, %s91
      %s93 = sphi 0, %s91
      %s94 = sphi 0, %s93
      %s108 = sphi 0, %s94
      %s112 = sphi 0, %s112
      %s114 = sphi 0, %s112
      %s115 = sphi 0, %s114
      %s129 = sphi 0, %s115
      %s135 = sphi 0, %s137
      %s138 = sphi 0, %s135
      %s139 = sphi 0, %s138
      %s155 = sphi 0, %s139
    $region4: #{tpu_custom_call.1} parent=1 // loop_header_branch
      %18 = sbr.rel (%p16) target = $region8
    $region5: #{tpu_custom_call.1} parent=1 // loop_body
      %s20 = ssub.s32 %s15, 1
      %s21 = ssub.s32 %s15, 2
      %s22 = sadd.s32 %s15, 1
      %s23 = ssub.s32 %s15, %s22
      %p24 = scmp.eq.s32.totalorder %s23, 0
      %s26 = sadd.s32 %s25, 1
      %s27 = scalar_select %p24, %s25, %s26
      %p30 = pneg %p24
      %p31 = scmp.eq.s32.totalorder %s15, 1
      %p32 = por %p30, %p31
      %p33 = scmp.ne.s32.totalorder %s25, %s28
      %p34 = scmp.eq.s32.totalorder %s15, 0
      %p35 = por %p33, %p34
      %p36 = scmp.ne.s32.totalorder %s25, %s28
      %p37 = scmp.eq.s32.totalorder %s20, 1
      %p38 = por %p36, %p37
      %p39 = scmp.ne.s32.totalorder %s28, %s29
      %p40 = scmp.eq.s32.totalorder %s20, 0
      %p41 = por %p39, %p40
      %p42 = scmp.ne.s32.totalorder %s28, %s29
      %p43 = scmp.eq.s32.totalorder %s21, 1
      %p44 = por %p42, %p43
      %p46 = scmp.ne.s32.totalorder %s29, %s45
      %p47 = scmp.eq.s32.totalorder %s21, 0
      %p48 = por %p46, %p47
      %s50 = sadd.s32 %s49, 1
      %p53 = scmp.eq.s32.totalorder %s15, 1
      %p54 = scmp.ne.s32.totalorder %s49, %s51
      %p55 = scmp.eq.s32.totalorder %s15, 0
      %p56 = por %p54, %p55
      %p57 = scmp.ne.s32.totalorder %s49, %s51
      %p58 = scmp.eq.s32.totalorder %s20, 1
      %p59 = por %p57, %p58
      %p60 = scmp.ne.s32.totalorder %s51, %s52
      %p61 = scmp.eq.s32.totalorder %s20, 0
      %p62 = por %p60, %p61
      %p63 = scmp.ne.s32.totalorder %s51, %s52
      %p64 = scmp.eq.s32.totalorder %s21, 1
      %p65 = por %p63, %p64
      %p67 = scmp.ne.s32.totalorder %s52, %s66
      %p68 = scmp.eq.s32.totalorder %s21, 0
      %p69 = por %p67, %p68
      %s71 = sadd.s32 %s70, 1
      %p74 = scmp.eq.s32.totalorder %s15, 1
      %p75 = scmp.ne.s32.totalorder %s70, %s72
      %p76 = scmp.eq.s32.totalorder %s15, 0
      %p77 = por %p75, %p76
      %p78 = scmp.ne.s32.totalorder %s70, %s72
      %p79 = scmp.eq.s32.totalorder %s20, 1
      %p80 = por %p78, %p79
      %p81 = scmp.ne.s32.totalorder %s72, %s73
      %p82 = scmp.eq.s32.totalorder %s20, 0
      %p83 = por %p81, %p82
      %p84 = scmp.ne.s32.totalorder %s72, %s73
      %p85 = scmp.eq.s32.totalorder %s21, 1
      %p86 = por %p84, %p85
      %p88 = scmp.ne.s32.totalorder %s73, %s87
      %p89 = scmp.eq.s32.totalorder %s21, 0
      %p90 = por %p88, %p89
      %s92 = sadd.s32 %s91, 1
      %p95 = scmp.eq.s32.totalorder %s15, 1
      %p96 = scmp.ne.s32.totalorder %s91, %s93
      %p97 = scmp.eq.s32.totalorder %s15, 0
      %p98 = por %p96, %p97
      %p99 = scmp.ne.s32.totalorder %s91, %s93
      %p100 = scmp.eq.s32.totalorder %s20, 1
      %p101 = por %p99, %p100
      %p102 = scmp.ne.s32.totalorder %s93, %s94
      %p103 = scmp.eq.s32.totalorder %s20, 0
      %p104 = por %p102, %p103
      %p105 = scmp.ne.s32.totalorder %s93, %s94
      %p106 = scmp.eq.s32.totalorder %s21, 1
      %p107 = por %p105, %p106
      %p109 = scmp.ne.s32.totalorder %s94, %s108
      %p110 = scmp.eq.s32.totalorder %s21, 0
      %p111 = por %p109, %p110
      %s113 = sadd.s32 %s112, 1
      %p116 = scmp.eq.s32.totalorder %s15, 1
      %p117 = scmp.ne.s32.totalorder %s112, %s114
      %p118 = scmp.eq.s32.totalorder %s15, 0
      %p119 = por %p117, %p118
      %p120 = scmp.ne.s32.totalorder %s112, %s114
      %p121 = scmp.eq.s32.totalorder %s20, 1
      %p122 = por %p120, %p121
      %p123 = scmp.ne.s32.totalorder %s114, %s115
      %p124 = scmp.eq.s32.totalorder %s20, 0
      %p125 = por %p123, %p124
      %p126 = scmp.ne.s32.totalorder %s114, %s115
      %p127 = scmp.eq.s32.totalorder %s21, 1
      %p128 = por %p126, %p127
      %p130 = scmp.ne.s32.totalorder %s115, %s129
      %p131 = scmp.eq.s32.totalorder %s21, 0
      %p132 = por %p130, %p131
      %s133 = ssub.s32 %s15, %s22
      %p134 = scmp.eq.s32.totalorder %s133, 0
      %s136 = sadd.s32 %s135, 1
      %s137 = scalar_select %p134, %s135, %s136
      %p140 = pneg %p134
      %p141 = scmp.eq.s32.totalorder %s15, 1
      %p142 = por %p140, %p141
      %p143 = scmp.ne.s32.totalorder %s135, %s138
      %p144 = scmp.eq.s32.totalorder %s15, 0
      %p145 = por %p143, %p144
      %p146 = scmp.ne.s32.totalorder %s135, %s138
      %p147 = scmp.eq.s32.totalorder %s20, 1
      %p148 = por %p146, %p147
      %p149 = scmp.ne.s32.totalorder %s138, %s139
      %p150 = scmp.eq.s32.totalorder %s20, 0
      %p151 = por %p149, %p150
      %p152 = scmp.ne.s32.totalorder %s138, %s139
      %p153 = scmp.eq.s32.totalorder %s21, 1
      %p154 = por %p152, %p153
      %p156 = scmp.ne.s32.totalorder %s139, %s155
      %p157 = scmp.eq.s32.totalorder %s21, 0
      %p158 = por %p156, %p157
      %p159 = scmp.le.s32.totalorder 1, %s15
      %p160 = scmp.lt.s32.totalorder %s15, 3
      %p161 = pnand %p159, %p160
      %p162 = pneg %p161
      // Predicated region
      $region9: #{tpu_custom_call.1} parent=5 // pred_check
        _
      $region10: #{tpu_custom_call.1} parent=5 // pred_check_branch
        %164 = sbr.rel (%p161) target = $region12
      $region11: #{tpu_custom_call.1} parent=5 // pred_region
        %s165 = ssub.s32 %s15, 1
        // Predicated region
        $region13: #{tpu_custom_call.1} parent=11 // pred_check
          %p166 = pneg %p62
        $region14: #{tpu_custom_call.1} parent=11 // pred_check_branch
          %168 = sbr.rel (%p166) target = $region16
        $region15: #{tpu_custom_call.1} parent=11 // pred_region
          _
        $region16: #{tpu_custom_call.1} parent=11 // pred_fallthru
          _
        // Predicated region
        $region17: #{tpu_custom_call.1} parent=11 // pred_check
          %p169 = pneg %p83
        $region18: #{tpu_custom_call.1} parent=11 // pred_check_branch
          %171 = sbr.rel (%p169) target = $region20
        $region19: #{tpu_custom_call.1} parent=11 // pred_region
          _
        $region20: #{tpu_custom_call.1} parent=11 // pred_fallthru
          _
        // Predicated region
        $region21: #{tpu_custom_call.1} parent=11 // pred_check
          %p172 = pneg %p104
        $region22: #{tpu_custom_call.1} parent=11 // pred_check_branch
          %174 = sbr.rel (%p172) target = $region24
        $region23: #{tpu_custom_call.1} parent=11 // pred_region
          _
        $region24: #{tpu_custom_call.1} parent=11 // pred_fallthru
          _
        // Predicated region
        $region25: #{tpu_custom_call.1} parent=11 // pred_check
          %p175 = pneg %p125
        $region26: #{tpu_custom_call.1} parent=11 // pred_check_branch
          %177 = sbr.rel (%p175) target = $region28
        $region27: #{tpu_custom_call.1} parent=11 // pred_region
          _
        $region28: #{tpu_custom_call.1} parent=11 // pred_fallthru
          _
      $region12: #{tpu_custom_call.1} parent=5 // pred_fallthru
        _
      %p178 = scmp.lt.s32.totalorder %s15, 2
      // Predicated region
      $region29: #{tpu_custom_call.1} parent=5 // pred_check
        %p179 = pneg %p178
      $region30: #{tpu_custom_call.1} parent=5 // pred_check_branch
        %181 = sbr.rel (%p179) target = $region32
      $region31: #{tpu_custom_call.1} parent=5 // pred_region
        // Predicated region
        $region33: #{tpu_custom_call.1} parent=31 // pred_check
          %p182 = pneg %p35
        $region34: #{tpu_custom_call.1} parent=31 // pred_check_branch
          %184 = sbr.rel (%p182) target = $region36
        $region35: #{tpu_custom_call.1} parent=31 // pred_region
          %s185 = smul.u32 16, %s15
          %p186 = scmp.lt.s32.totalorder %s185, 31
          %s187 = scalar_select %p186, %s185, 31
          %s188 = smul.addr %s187, 8
          %s189 = scalar_lea.vmem %s0, %s188
          %s190 = smul.u32 16, %s15
        $region36: #{tpu_custom_call.1} parent=31 // pred_fallthru
          _
      $region32: #{tpu_custom_call.1} parent=5 // pred_fallthru
        _
      %p191 = scmp.le.s32.totalorder 1, %s15
      %p192 = scmp.lt.s32.totalorder %s15, 3
      %p193 = pnand %p191, %p192
      %p194 = pneg %p193
      // Predicated region
      $region37: #{tpu_custom_call.1} parent=5 // pred_check
        _
      $region38: #{tpu_custom_call.1} parent=5 // pred_check_branch
        %196 = sbr.rel (%p193) target = $region40
      $region39: #{tpu_custom_call.1} parent=5 // pred_region
        %s197 = ssub.s32 %s15, 1
        %s198 = smul.u32 16, %s20
        %p199 = scmp.lt.s32.totalorder %s198, 31
        %s200 = scalar_select %p199, %s198, 31
        %s201 = smul.addr %s200, 8
        %s202 = scalar_lea.vmem %s0, %s201
        %p203 = pneg %p41
        %p204 = pneg %p38
        %p205 = pneg %p62
        %p206 = pneg %p59
        %p207 = pneg %p83
        %p208 = pneg %p80
        %p209 = pneg %p104
        %p210 = pneg %p101
        %p211 = pneg %p125
        %p212 = pneg %p122
        %p213 = pneg %p151
        %p214 = pneg %p148
        %s215 = sand.u32 %s138, 1
        %s216 = scalar_lea.sflag [#allocation4], %s215
        %s217 = sand.u32 %s138, 1
        %s218 = scalar_lea.vmem [#allocation3], %s217
        %s219 = smul.u32 16, %s20
        %p220 = scmp.lt.s32.totalorder %s219, 31
        %s221 = scalar_select %p220, %s219, 31
        %s222 = smul.addr %s221, 8
        %s223 = scalar_lea.vmem %s0, %s222
        %s224 = smul.u32 16, %s20
        %v225 = vld [vmem:[%s223] sm:$0xff]
        %v226 = vld [vmem:[%s223 + $0x8] sm:$0xff]
        %v227 = vld [vmem:[%s223 + $0x10] sm:$0xff]
        %v228 = vld [vmem:[%s223 + $0x18] sm:$0xff]
        %v229 = vld [vmem:[%s223 + $0x20] sm:$0xff]
        %v230 = vld [vmem:[%s223 + $0x28] sm:$0xff]
        %v231 = vld [vmem:[%s223 + $0x30] sm:$0xff]
        %v232 = vld [vmem:[%s223 + $0x38] sm:$0xff]
        %v233 = vld [vmem:[%s223 + $0x40] sm:$0xff]
        %v234 = vld [vmem:[%s223 + $0x48] sm:$0xff]
        %v235 = vld [vmem:[%s223 + $0x50] sm:$0xff]
        %v236 = vld [vmem:[%s223 + $0x58] sm:$0xff]
        %v237 = vld [vmem:[%s223 + $0x60] sm:$0xff]
        %v238 = vld [vmem:[%s223 + $0x68] sm:$0xff]
        %v239 = vld [vmem:[%s223 + $0x70] sm:$0xff]
        %v240 = vld [vmem:[%s223 + $0x78] sm:$0xff]
        %v241 = vld [vmem:[%s1] sm:$0xff]
        %v242 = vld [vmem:[%s1 + $0x8] sm:$0xff]
        %v243 = vld [vmem:[%s1 + $0x10] sm:$0xff]
        %v244 = vld [vmem:[%s1 + $0x18] sm:$0xff]
        %v245 = vld [vmem:[%s1 + $0x20] sm:$0xff]
        %v246 = vld [vmem:[%s1 + $0x28] sm:$0xff]
        %v247 = vld [vmem:[%s1 + $0x30] sm:$0xff]
        %v248 = vld [vmem:[%s1 + $0x38] sm:$0xff]
        %v249 = vld [vmem:[%s2] sm:$0xff]
        %v250 = vld [vmem:[%s2 + $0x8] sm:$0xff]
        %v251 = vld [vmem:[%s2 + $0x10] sm:$0xff]
        %v252 = vld [vmem:[%s2 + $0x18] sm:$0xff]
        %v253 = vld [vmem:[%s2 + $0x20] sm:$0xff]
        %v254 = vld [vmem:[%s2 + $0x28] sm:$0xff]
        %v255 = vld [vmem:[%s2 + $0x30] sm:$0xff]
        %v256 = vld [vmem:[%s2 + $0x38] sm:$0xff]
        %258 = vset.pattern.permute.xlu0 0
        %259 = vperm.xlu0 %258, %v249
        %v260 = vpop.permute.xlu0 %259
        %263 = vset.pattern.permute.xlu0 0
        %264 = vperm.xlu0 %263, %v250
        %v265 = vpop.permute.xlu0 %264
        %268 = vset.pattern.permute.xlu0 0
        %269 = vperm.xlu0 %268, %v251
        %v270 = vpop.permute.xlu0 %269
        %273 = vset.pattern.permute.xlu0 0
        %274 = vperm.xlu0 %273, %v252
        %v275 = vpop.permute.xlu0 %274
        %278 = vset.pattern.permute.xlu0 0
        %279 = vperm.xlu0 %278, %v253
        %v280 = vpop.permute.xlu0 %279
        %283 = vset.pattern.permute.xlu0 0
        %284 = vperm.xlu0 %283, %v254
        %v285 = vpop.permute.xlu0 %284
        %288 = vset.pattern.permute.xlu0 0
        %289 = vperm.xlu0 %288, %v255
        %v290 = vpop.permute.xlu0 %289
        %293 = vset.pattern.permute.xlu0 0
        %294 = vperm.xlu0 %293, %v256
        %v295 = vpop.permute.xlu0 %294
        %vm297 = vcmask 523264
        %v299 = vsel %vm297, %v241, 0
        %v302 = vsel %vm297, %v242, 0
        %v305 = vsel %vm297, %v243, 0
        %v308 = vsel %vm297, %v244, 0
        %v311 = vsel %vm297, %v245, 0
        %v314 = vsel %vm297, %v246, 0
        %v317 = vsel %vm297, %v247, 0
        %v320 = vsel %vm297, %v248, 0
        %v323 = vsel %vm297, %v225, 0
        %v326 = vsel %vm297, %v226, 0
        %v329 = vsel %vm297, %v227, 0
        %v332 = vsel %vm297, %v228, 0
        %v335 = vsel %vm297, %v229, 0
        %v338 = vsel %vm297, %v230, 0
        %v341 = vsel %vm297, %v231, 0
        %v344 = vsel %vm297, %v232, 0
        %v347 = vsel %vm297, %v233, 0
        %v350 = vsel %vm297, %v234, 0
        %v353 = vsel %vm297, %v235, 0
        %v356 = vsel %vm297, %v236, 0
        %v359 = vsel %vm297, %v237, 0
        %v362 = vsel %vm297, %v238, 0
        %v365 = vsel %vm297, %v239, 0
        %v368 = vsel %vm297, %v240, 0
        %370 = vmatprep.subr.mxu0 0.0
        %371 = vmatpush1.xpose.msra.mxu0 %v323
        %372 = vmatprep.subr.mxu0 0.0
        %373 = vmatpush1.xpose.msra.mxu0 %v326
        %374 = vmatprep.subr.mxu0 0.0
        %375 = vmatpush1.xpose.msra.mxu0 %v329
        %376 = vmatprep.subr.mxu0 0.0
        %377 = vmatpush1.xpose.msra.mxu0 %v332
        %378 = vmatprep.subr.mxu0 0.0
        %379 = vmatpush1.xpose.msra.mxu0 %v335
        %380 = vmatprep.subr.mxu0 0.0
        %381 = vmatpush1.xpose.msra.mxu0 %v338
        %382 = vmatprep.subr.mxu0 0.0
        %383 = vmatpush1.xpose.msra.mxu0 %v341
        %384 = vmatprep.subr.mxu0 0.0
        %385 = vmatpush1.xpose.msra.mxu0 %v344
        %386 = vmatprep.subr.mxu0 0.0
        %387 = vmatpush1.xpose.msra.mxu0 %v347
        %388 = vmatprep.subr.mxu0 0.0
        %389 = vmatpush1.xpose.msra.mxu0 %v350
        %390 = vmatprep.subr.mxu0 0.0
        %391 = vmatpush1.xpose.msra.mxu0 %v353
        %392 = vmatprep.subr.mxu0 0.0
        %393 = vmatpush1.xpose.msra.mxu0 %v356
        %394 = vmatprep.subr.mxu0 0.0
        %395 = vmatpush1.xpose.msra.mxu0 %v359
        %396 = vmatprep.subr.mxu0 0.0
        %397 = vmatpush1.xpose.msra.mxu0 %v362
        %398 = vmatprep.subr.mxu0 0.0
        %399 = vmatpush1.xpose.msra.mxu0 %v365
        %400 = vmatprep.subr.mxu0 0.0
        %401 = vmatpush1.xpose.msra.mxu0 %v368
        %402 = vmatprep.subr.mxu0 0.0
        %403 = vmatpush1.xpose.msra.mxu0 0.0
        %404 = vmatprep.subr.mxu0 0.0
        %405 = vmatpush1.xpose.msra.mxu0 0.0
        %406 = vmatprep.subr.mxu0 0.0
        %407 = vmatpush1.xpose.msra.mxu0 0.0
        %408 = vmatprep.subr.mxu0 0.0
        %409 = vmatpush1.xpose.msra.mxu0 0.0
        %410 = vmatprep.subr.mxu0 0.0
        %411 = vmatpush1.xpose.msra.mxu0 0.0
        %412 = vmatprep.subr.mxu0 0.0
        %413 = vmatpush1.xpose.msra.mxu0 0.0
        %414 = vmatprep.subr.mxu0 0.0
        %415 = vmatpush1.xpose.msra.mxu0 0.0
        %416 = vmatprep.subr.mxu0 0.0
        %417 = vmatpush1.xpose.msra.mxu0 0.0
        %418 = vmatprep.subr.mxu0 0.0
        %419 = vmatpush1.xpose.msra.mxu0 0.0
        %420 = vmatprep.subr.mxu0 0.0
        %421 = vmatpush1.xpose.msra.mxu0 0.0
        %422 = vmatprep.subr.mxu0 0.0
        %423 = vmatpush1.xpose.msra.mxu0 0.0
        %424 = vmatprep.subr.mxu0 0.0
        %425 = vmatpush1.xpose.msra.mxu0 0.0
        %426 = vmatprep.subr.mxu0 0.0
        %427 = vmatpush1.xpose.msra.mxu0 0.0
        %428 = vmatprep.subr.mxu0 0.0
        %429 = vmatpush1.xpose.msra.mxu0 0.0
        %430 = vmatprep.subr.mxu0 0.0
        %431 = vmatpush1.xpose.msra.mxu0 0.0
        %432 = vmatprep.subr.mxu0 0.0
        %433 = vmatpush1.xpose.msra.mxu0 0.0
        %434 = vmatprep.mubr.f32.mxu0 0.0
        %435 = vmatmul.mubr.f32.gmra.mrb[0].mxu0 %v299
        %v436 = vpop.f32.mrb[0].mxu0
        %v437 = vadd.f32 %v260, %v436
        %v438 = vpop.f32.mrb[0].mxu0
        %439 = vmatprep.mubr.f32.mxu0 0.0
        %440 = vmatmul.mubr.f32.gmra.mrb[0].mxu0 %v302
        %v441 = vpop.f32.mrb[0].mxu0
        %v442 = vadd.f32 %v265, %v441
        %v443 = vpop.f32.mrb[0].mxu0
        %444 = vmatprep.mubr.f32.mxu0 0.0
        %445 = vmatmul.mubr.f32.gmra.mrb[0].mxu0 %v305
        %v446 = vpop.f32.mrb[0].mxu0
        %v447 = vadd.f32 %v270, %v446
        %v448 = vpop.f32.mrb[0].mxu0
        %449 = vmatprep.mubr.f32.mxu0 0.0
        %450 = vmatmul.mubr.f32.gmra.mrb[0].mxu0 %v308
        %v451 = vpop.f32.mrb[0].mxu0
        %v452 = vadd.f32 %v275, %v451
        %v453 = vpop.f32.mrb[0].mxu0
        %454 = vmatprep.mubr.f32.mxu0 0.0
        %455 = vmatmul.mubr.f32.gmra.mrb[0].mxu0 %v311
        %v456 = vpop.f32.mrb[0].mxu0
        %v457 = vadd.f32 %v280, %v456
        %v458 = vpop.f32.mrb[0].mxu0
        %459 = vmatprep.mubr.f32.mxu0 0.0
        %460 = vmatmul.mubr.f32.gmra.mrb[0].mxu0 %v314
        %v461 = vpop.f32.mrb[0].mxu0
        %v462 = vadd.f32 %v285, %v461
        %v463 = vpop.f32.mrb[0].mxu0
        %464 = vmatprep.mubr.f32.mxu0 0.0
        %465 = vmatmul.mubr.f32.gmra.mrb[0].mxu0 %v317
        %v466 = vpop.f32.mrb[0].mxu0
        %v467 = vadd.f32 %v290, %v466
        %v468 = vpop.f32.mrb[0].mxu0
        %469 = vmatprep.mubr.f32.mxu0 0.0
        %470 = vmatmul.mubr.f32.gmra.mrb[0].mxu0 %v320
        %v471 = vpop.f32.mrb[0].mxu0
        %v472 = vadd.f32 %v295, %v471
        %v473 = vpop.f32.mrb[0].mxu0
        %474 = vdwg.mxu0
        %v475 = vmax.f32 %v437, 0.0
        %v476 = vmax.f32 %v442, 0.0
        %v477 = vmax.f32 %v447, 0.0
        %v478 = vmax.f32 %v452, 0.0
        %v479 = vmax.f32 %v457, 0.0
        %v480 = vmax.f32 %v462, 0.0
        %v481 = vmax.f32 %v467, 0.0
        %v482 = vmax.f32 %v472, 0.0
        %v483 = vld [vmem:[%s3] sm:$0x1]
        %s484 = sld [smem:[#allocation2]]
        %v485 = vstv %s484
        %v487 = vsel %vm297, %v483, 0
        %489 = vmatprep.subr.mxu0 0.0
        %490 = vmatpush1.msra.mxu0 %v475
        %491 = vmatprep.subr.mxu0 0.0
        %492 = vmatpush1.msra.mxu0 %v476
        %493 = vmatprep.subr.mxu0 0.0
        %494 = vmatpush1.msra.mxu0 %v477
        %495 = vmatprep.subr.mxu0 0.0
        %496 = vmatpush1.msra.mxu0 %v478
        %497 = vmatprep.subr.mxu0 0.0
        %498 = vmatpush1.msra.mxu0 %v479
        %499 = vmatprep.subr.mxu0 0.0
        %500 = vmatpush1.msra.mxu0 %v480
        %501 = vmatprep.subr.mxu0 0.0
        %502 = vmatpush1.msra.mxu0 %v481
        %503 = vmatprep.subr.mxu0 0.0
        %504 = vmatpush1.msra.mxu0 %v482
        %505 = vmatprep.subr.mxu0 0.0
        %506 = vmatpush1.msra.mxu0 0.0
        %507 = vmatprep.subr.mxu0 0.0
        %508 = vmatpush1.msra.mxu0 0.0
        %509 = vmatprep.subr.mxu0 0.0
        %510 = vmatpush1.msra.mxu0 0.0
        %511 = vmatprep.subr.mxu0 0.0
        %512 = vmatpush1.msra.mxu0 0.0
        %513 = vmatprep.subr.mxu0 0.0
        %514 = vmatpush1.msra.mxu0 0.0
        %515 = vmatprep.subr.mxu0 0.0
        %516 = vmatpush1.msra.mxu0 0.0
        %517 = vmatprep.subr.mxu0 0.0
        %518 = vmatpush1.msra.mxu0 0.0
        %519 = vmatprep.subr.mxu0 0.0
        %520 = vmatpush1.msra.mxu0 0.0
        %521 = vmatprep.subr.mxu0 0.0
        %522 = vmatpush1.msra.mxu0 0.0
        %523 = vmatprep.subr.mxu0 0.0
        %524 = vmatpush1.msra.mxu0 0.0
        %525 = vmatprep.subr.mxu0 0.0
        %526 = vmatpush1.msra.mxu0 0.0
        %527 = vmatprep.subr.mxu0 0.0
        %528 = vmatpush1.msra.mxu0 0.0
        %529 = vmatprep.subr.mxu0 0.0
        %530 = vmatpush1.msra.mxu0 0.0
        %531 = vmatprep.subr.mxu0 0.0
        %532 = vmatpush1.msra.mxu0 0.0
        %533 = vmatprep.subr.mxu0 0.0
        %534 = vmatpush1.msra.mxu0 0.0
        %535 = vmatprep.subr.mxu0 0.0
        %536 = vmatpush1.msra.mxu0 0.0
        %537 = vmatprep.subr.mxu0 0.0
        %538 = vmatpush1.msra.mxu0 0.0
        %539 = vmatprep.subr.mxu0 0.0
        %540 = vmatpush1.msra.mxu0 0.0
        %541 = vmatprep.subr.mxu0 0.0
        %542 = vmatpush1.msra.mxu0 0.0
        %543 = vmatprep.subr.mxu0 0.0
        %544 = vmatpush1.msra.mxu0 0.0
        %545 = vmatprep.subr.mxu0 0.0
        %546 = vmatpush1.msra.mxu0 0.0
        %547 = vmatprep.subr.mxu0 0.0
        %548 = vmatpush1.msra.mxu0 0.0
        %549 = vmatprep.subr.mxu0 0.0
        %550 = vmatpush1.msra.mxu0 0.0
        %551 = vmatprep.subr.mxu0 0.0
        %552 = vmatpush1.msra.mxu0 0.0
        %553 = vmatprep.mubr.f32.mxu0 0.0
        %554 = vmatmul.mubr.f32.gmra.mrb[0].mxu0 %v487
        %v555 = vpop.f32.mrb[0].mxu0
        %v556 = vadd.f32 %v485, %v555
        %v557 = vpop.f32.mrb[0].mxu0
        %558 = vdwg.mxu0
        %559 = vst [vmem:[%s218] sm:$0x1] %v556
        %s560 = sand.u32 %s138, 1
        %s561 = scalar_lea.sflag [#allocation4], %s560
        %s562 = sand.u32 %s138, 1
        %s563 = scalar_lea.vmem [#allocation3], %s562
        // Predicated region
        $region41: #{tpu_custom_call.1} parent=39 // pred_check
          %p564 = pneg %p148
        $region42: #{tpu_custom_call.1} parent=39 // pred_check_branch
          %566 = sbr.rel (%p564) target = $region44
        $region43: #{tpu_custom_call.1} parent=39 // pred_region
          %s568 = ssub.s32 16, 16
          %569 = vsyncadd %s561, %s568
          %s570 = smul.addr %s20, 16
          %s571 = scalar_lea.hbm %s5, %s570
          %s573 = sshll.u32 %s563, 4
          %s574 = int_to_ptr.vmem [resolvable:$true] %s573
          %576 = dma.vmem_to_hbm [thread:$0]  %s574, 16, %s571, %s561
        $region44: #{tpu_custom_call.1} parent=39 // pred_fallthru
          _
      $region40: #{tpu_custom_call.1} parent=5 // pred_fallthru
        _
      %p577 = scmp.le.s32.totalorder 2, %s15
      // Predicated region
      $region45: #{tpu_custom_call.1} parent=5 // pred_check
        %p578 = pneg %p577
      $region46: #{tpu_custom_call.1} parent=5 // pred_check_branch
        %580 = sbr.rel (%p578) target = $region48
      $region47: #{tpu_custom_call.1} parent=5 // pred_region
        %s581 = ssub.s32 %s15, 2
        // Predicated region
        $region49: #{tpu_custom_call.1} parent=47 // pred_check
          %p582 = pneg %p154
        $region50: #{tpu_custom_call.1} parent=47 // pred_check_branch
          %584 = sbr.rel (%p582) target = $region52
        $region51: #{tpu_custom_call.1} parent=47 // pred_region
          %s585 = sand.u32 %s139, 1
          %s586 = scalar_lea.sflag [#allocation4], %s585
          %s587 = sand.u32 %s139, 1
          %s588 = scalar_lea.vmem [#allocation3], %s587
          %589 = dma.done %s586, 16
        $region52: #{tpu_custom_call.1} parent=47 // pred_fallthru
          _
      $region48: #{tpu_custom_call.1} parent=5 // pred_fallthru
        _
    $region6: #{tpu_custom_call.1} parent=1 // loop_footer
      %s19 = sadd.s32 1, %s15
    $region7: #{tpu_custom_call.1} parent=1 // loop_footer_branch
      %14 = sbr.rel target = $region3
    $region8: #{tpu_custom_call.1} parent=1 // loop_exit
      _
    %590 = vsyncpa [#allocation4], 1
    %s591 = scalar_lea.sflag [#allocation4], 1
    %592 = vsyncpa %s591, 1

</llo_original>
